<compile_context>
chip_gen: v7x
topology: tpu7x:2x2x1
jax: 0.10.0
libtpu: 0.0.40
codegen_flags: <defaults>
</compile_context>

<pallas_src>
import jax
import jax.numpy as jnp
from jax.experimental import pallas as pl
from jax.experimental.pallas import tpu as pltpu

_LANE_W = 1024              # lane-dense last dim for large inputs (mult of 128)
_TM = 512                   # rows per block -> 512*1024*4B = 2 MiB per tile
_SMALL_LANE_W = 128         # minimal lane-dense width for small inputs
_PALLAS_TILED_MIN = 1 << 16 # below this, use the single-block path


def _hydrogen_psi_kernel(c_ref, x_ref, o_ref):
    # c_ref: SMEM (2,) = [2*log(alpha), 2*alpha]  (precomputed in wrapper)
    # x_ref / o_ref: (tm, lane_w) float32 VMEM tiles.
    c_log = c_ref[0]
    c_lin = c_ref[1]
    x = x_ref[...]
    # 2*(log(alpha) + log(x) - alpha*x) == c_log + 2*log(x) - c_lin*x
    o_ref[...] = c_log + 2.0 * jnp.log(x) - c_lin * x


def _hydrogen_psi_ref(x, alpha):
    alpha = jnp.asarray(alpha, dtype=x.dtype)
    return 2.0 * (jnp.log(alpha) + jnp.log(x) - alpha * x)


def _launch(x2d, consts, tm):
    rows, lane_w = x2d.shape
    grid = (rows // tm,)
    n = x2d.size
    return pl.pallas_call(
        _hydrogen_psi_kernel,
        out_shape=jax.ShapeDtypeStruct((rows, lane_w), jnp.float32),
        grid=grid,
        in_specs=[
            pl.BlockSpec(memory_space=pltpu.SMEM),          # [2*log(a), 2*a]
            pl.BlockSpec((tm, lane_w), lambda i: (i, 0)),   # x tile
        ],
        out_specs=pl.BlockSpec((tm, lane_w), lambda i: (i, 0)),
        compiler_params=pltpu.CompilerParams(
            dimension_semantics=("parallel",),   # megacore sharding on v7x
            vmem_limit_bytes=64 * 1024 * 1024,
        ),
        cost_estimate=pl.CostEstimate(
            flops=3 * n, transcendentals=n, bytes_accessed=8 * n),
    )(consts, x2d)


def hydrogen_trial_wavefunction(x, alpha):
    """Forward pass of HydrogenTrialWavefunction as a Pallas TPU kernel.

    Accepts any input shape; internally flattens to a lane-dense 2-D slab,
    streams it through a (double-buffered) pipeline, and restores the shape.
    """
    x = jnp.asarray(x, dtype=jnp.float32)
    alpha_f = jnp.asarray(alpha, dtype=jnp.float32)

    total = x.size
    if total == 0:
        return jnp.zeros_like(x)

    # Scalar constants hoisted out of the kernel (one-time 0-d XLA ops).
    consts = jnp.stack([2.0 * jnp.log(alpha_f), 2.0 * alpha_f]).astype(jnp.float32)

    flat = x.reshape(-1)

    if total >= _PALLAS_TILED_MIN:
        # Tiled path: pad to a multiple of TM*LANE_W with ones (log(1)=0, so
        # padded lanes never produce NaN/inf), reshape to (rows, LANE_W).
        lane_w, tm = _LANE_W, _TM
        block_elems = tm * lane_w
        padded_total = pl.cdiv(total, block_elems) * block_elems
        if padded_total != total:
            flat = jnp.pad(flat, (0, padded_total - total), constant_values=1.0)
        x2d = flat.reshape(padded_total // lane_w, lane_w)
        out2d = _launch(x2d, consts, tm)
    else:
        # Small path: single block covering the whole padded slab (block shape
        # equals the full array dims, so no (8,128) divisibility constraint).
        lane_w = _SMALL_LANE_W
        padded_total = pl.cdiv(total, lane_w) * lane_w
        if padded_total != total:
            flat = jnp.pad(flat, (0, padded_total - total), constant_values=1.0)
        x2d = flat.reshape(padded_total // lane_w, lane_w)
        out2d = _launch(x2d, consts, x2d.shape[0])

    return out2d.reshape(-1)[:total].reshape(x.shape)


if __name__ == "__main__":
    key = jax.random.PRNGKey(0)
    alpha = 0.9  # deterministic parameter init (nn.Parameter(torch.tensor(alpha)))
    k1, k2 = jax.random.split(key)

    # Small-shape input consistent with the module (positive radial samples x).
    # Exercises the single-block Pallas path (and the pad/repack path since
    # 256*16 is not a multiple of 128 rows worth of lanes).
    x_small = jax.random.uniform(k1, (256, 16), dtype=jnp.float32,
                                 minval=0.1, maxval=3.0)
    out_small = jax.block_until_ready(hydrogen_trial_wavefunction(x_small, alpha))
    ref_small = _hydrogen_psi_ref(x_small, alpha)
    assert out_small.shape == x_small.shape
    assert jnp.allclose(out_small, ref_small, rtol=1e-5, atol=1e-5), \
        "mismatch vs reference (single-block pallas path)"

    # Modest larger input to exercise the tiled, double-buffered pipeline
    # (non-aligned flat size on purpose to cover padding there too).
    x_big = jax.random.uniform(k2, (512, 300), dtype=jnp.float32,
                               minval=0.1, maxval=3.0)
    out_big = jax.block_until_ready(hydrogen_trial_wavefunction(x_big, alpha))
    ref_big = _hydrogen_psi_ref(x_big, alpha)
    assert out_big.shape == x_big.shape
    assert jnp.allclose(out_big, ref_big, rtol=1e-5, atol=1e-5), \
        "mismatch vs reference (tiled pallas path)"

    print("KERNEL_OK")
</pallas_src>

<mosaic_0001>
module attributes {stable_mosaic.version = 11 : i64} {
  func.func @_hydrogen_psi_kernel(%arg0: i32, %arg1: memref<2xf32, #tpu.memory_space<smem>>, %arg2: memref<32x128xf32, #tpu.memory_space<vmem>>, %arg3: memref<32x128xf32, #tpu.memory_space<vmem>>) attributes {dimension_semantics = [#tpu.dimension_semantics<parallel>], iteration_bounds = array<i64: 1>, scalar_prefetch = 0 : i64, scratch_operands = 0 : i64, tpu.core_type = #tpu.core_type<tc>, window_params = [{transform_indices = @transform_0, window_bounds = array<i64: 2>}, {transform_indices = @transform_1, window_bounds = array<i64: 32, 128>}, {transform_indices = @transform_2, window_bounds = array<i64: 32, 128>}]} {
    %c0 = arith.constant 0 : index
    %0 = memref.load %arg1[%c0] : memref<2xf32, #tpu.memory_space<smem>>
    %c1 = arith.constant 1 : index
    %1 = memref.load %arg1[%c1] : memref<2xf32, #tpu.memory_space<smem>>
    %c0_0 = arith.constant 0 : index
    %c0_1 = arith.constant 0 : index
    %2 = vector.load %arg2[%c0_0, %c0_1] : memref<32x128xf32, #tpu.memory_space<vmem>>, vector<32x128xf32>
    %3 = math.log %2 : vector<32x128xf32>
    %cst = arith.constant 2.000000e+00 : f32
    %4 = vector.broadcast %cst : f32 to vector<32x128xf32>
    %5 = arith.mulf %4, %3 : vector<32x128xf32>
    %6 = vector.broadcast %0 : f32 to vector<32x128xf32>
    %7 = arith.addf %6, %5 : vector<32x128xf32>
    %8 = vector.broadcast %1 : f32 to vector<32x128xf32>
    %9 = arith.mulf %8, %2 : vector<32x128xf32>
    %10 = arith.subf %7, %9 : vector<32x128xf32>
    %c0_2 = arith.constant 0 : index
    %c0_3 = arith.constant 0 : index
    %11 = vector.load %arg3[%c0_2, %c0_3] : memref<32x128xf32, #tpu.memory_space<vmem>>, vector<32x128xf32>
    tpu.vector_store %arg3[%c0_2, %c0_3], %10 {strides = array<i32>} : memref<32x128xf32, #tpu.memory_space<vmem>>, vector<32x128xf32>,
    return
  }
  func.func @transform_0(%arg0: i32) -> i32 {
    %c0_i32 = arith.constant 0 : i32
    %c0_i32_0 = arith.constant 0 : i32
    return %c0_i32 : i32
  }
  func.func @transform_1(%arg0: i32) -> (i32, i32) {
    %c0_i32 = arith.constant 0 : i32
    %c0_i32_0 = arith.constant 0 : i32
    return %arg0, %c0_i32 : i32, i32
  }
  func.func @transform_2(%arg0: i32) -> (i32, i32) {
    %c0_i32 = arith.constant 0 : i32
    %c0_i32_0 = arith.constant 0 : i32
    return %arg0, %c0_i32 : i32, i32
  }
}

</mosaic_0001>

<llo_original>
// kernel: tpu_custom_call.1
$region0: #{tpu_custom_call.1}
  #allocation0 [shape = 'u32[]', space=smem, size = 0x4, offset = 0x4, fixed_abs, tag = 'smem constant byte address 0x4 - core index']
  #allocation1 [shape = 'u32[144,128]{1,0:T(1,128)}', space=vmem, size = 0x12000, scoped, tag = 'internal scratch']
  %s0 = inlined_call_operand.hbm [shape: f32[2], index: 0, kind: input, shape index: {}]
  %s1 = inlined_call_operand.hbm [shape: f32[32,128], index: 1, kind: input, shape index: {}]
  %s2 = inlined_call_operand.hbm [shape: f32[32,128], index: 2, kind: output, shape index: {}]
  %s3 = sld [smem:[#allocation0]]
  $region26: #{tpu_custom_call.1} parent=0
    _
  %s5 = ssub.s32 1, %s3
  %s6 = scalar_select 0, %s5, %s3
  $region1: #{tpu_custom_call.1} parent=0
    #allocation2 [shape = 'u8[512]{0}', space=smem, size = 0x200, scoped, tag = 'input window, operand 0, single buffered']
    #allocation3 [shape = 's32[1]{0}', space=sflag, size = 0x4, scoped, tag = 'scoped memory for tpu_custom_call.1']
    #allocation4 [shape = 's32[1]{0}', space=sflag, size = 0x4, scoped, tag = 'scoped memory for tpu_custom_call.1']
    #allocation5 [shape = 's32[1]{0}', space=sflag, size = 0x4, scoped, tag = 'scoped memory for tpu_custom_call.1']
    #allocation6 [shape = 'u8[16384]{0}', space=vmem, size = 0x4000, scoped, tag = 'input window, operand 1, single buffered']
    #allocation7 [shape = 'u8[16384]{0}', space=vmem, size = 0x4000, scoped, tag = 'output window, operand 0, single buffered']
    %7 = vsyncpa [#allocation5], 0
    %8 = vsyncpa [#allocation3], 0
    %9 = vsyncpa [#allocation4], 0
    // Predicated region
    $region2: #{tpu_custom_call.1} parent=1 // pred_check
      _
    $region3: #{tpu_custom_call.1} parent=1 // pred_check_branch
      %11 = sbr.rel (0) target = $region5
    $region4: #{tpu_custom_call.1} parent=1 // pred_region
      %s13 = ssub.s32 16, 16
      %14 = vsyncadd [#allocation5], %s13
      %17 = dma.hbm_to_smem %s0, 16, [#allocation2], [#allocation5]
    $region5: #{tpu_custom_call.1} parent=1 // pred_fallthru
      _
    // Predicated region
    $region6: #{tpu_custom_call.1} parent=1 // pred_check
      _
    $region7: #{tpu_custom_call.1} parent=1 // pred_check_branch
      %19 = sbr.rel (0) target = $region9
    $region8: #{tpu_custom_call.1} parent=1 // pred_region
      %s21 = ssub.s32 512, 512
      %22 = vsyncadd [#allocation3], %s21
      %s23 = sshll.u32 [#allocation6], 4
      %s24 = int_to_ptr.vmem [resolvable:$true] %s23
      %29 = dma.hbm_to_vmem [thread:$0]  %s1, 512, %s24, [#allocation3], 128, 128, 8
    $region9: #{tpu_custom_call.1} parent=1 // pred_fallthru
      _
    // Predicated region
    $region10: #{tpu_custom_call.1} parent=1 // pred_check
      _
    $region11: #{tpu_custom_call.1} parent=1 // pred_check_branch
      %31 = sbr.rel (0) target = $region13
    $region12: #{tpu_custom_call.1} parent=1 // pred_region
      %32 = dma.done [#allocation5], 16
    $region13: #{tpu_custom_call.1} parent=1 // pred_fallthru
      _
    // Predicated region
    $region14: #{tpu_custom_call.1} parent=1 // pred_check
      _
    $region15: #{tpu_custom_call.1} parent=1 // pred_check_branch
      %34 = sbr.rel (0) target = $region17
    $region16: #{tpu_custom_call.1} parent=1 // pred_region
      %35 = dma.done [#allocation3], 512
    $region17: #{tpu_custom_call.1} parent=1 // pred_fallthru
      _
    %36 = sfence
    %s37 = sld [smem:[#allocation2]]
    %s38 = sld [smem:[#allocation2 + $0x1]]
    %v39 = vld [vmem:[#allocation6] sm:$0xff]
    %v40 = vld [vmem:[#allocation6 + $0x8] sm:$0xff]
    %v41 = vld [vmem:[#allocation6 + $0x10] sm:$0xff]
    %v42 = vld [vmem:[#allocation6 + $0x18] sm:$0xff]
    %v43 = vlog2.pop %v39
    %v44 = vmul.f32 %v43, 0.6931472
    %v45 = vlog2.pop %v40
    %v46 = vmul.f32 %v45, 0.6931472
    %v47 = vlog2.pop %v41
    %v48 = vmul.f32 %v47, 0.6931472
    %v49 = vlog2.pop %v42
    %v50 = vmul.f32 %v49, 0.6931472
    %v51 = vmul.f32 %v44, 2.0
    %v52 = vmul.f32 %v46, 2.0
    %v53 = vmul.f32 %v48, 2.0
    %v54 = vmul.f32 %v50, 2.0
    %v55 = vstv %s37
    %v56 = vadd.f32 %v55, %v51
    %v57 = vadd.f32 %v55, %v52
    %v58 = vadd.f32 %v55, %v53
    %v59 = vadd.f32 %v55, %v54
    %v60 = vstv %s38
    %v61 = vmul.f32 %v60, %v39
    %v62 = vmul.f32 %v60, %v40
    %v63 = vmul.f32 %v60, %v41
    %v64 = vmul.f32 %v60, %v42
    %v65 = vsub.f32 %v56, %v61
    %v66 = vsub.f32 %v57, %v62
    %v67 = vsub.f32 %v58, %v63
    %v68 = vsub.f32 %v59, %v64
    %69 = vst [vmem:[#allocation7] sm:$0xff] %v65
    %70 = vst [vmem:[#allocation7 + $0x8] sm:$0xff] %v66
    %71 = vst [vmem:[#allocation7 + $0x10] sm:$0xff] %v67
    %72 = vst [vmem:[#allocation7 + $0x18] sm:$0xff] %v68
    // Predicated region
    $region18: #{tpu_custom_call.1} parent=1 // pred_check
      _
    $region19: #{tpu_custom_call.1} parent=1 // pred_check_branch
      %74 = sbr.rel (0) target = $region21
    $region20: #{tpu_custom_call.1} parent=1 // pred_region
      %s76 = ssub.s32 512, 512
      %77 = vsyncadd [#allocation4], %s76
      %s78 = sshll.u32 [#allocation7], 4
      %s79 = int_to_ptr.vmem [resolvable:$true] %s78
      %84 = dma.vmem_to_hbm [thread:$0]  %s79, 512, %s2, [#allocation4], 128, 128, 8
    $region21: #{tpu_custom_call.1} parent=1 // pred_fallthru
      _
    // Predicated region
    $region22: #{tpu_custom_call.1} parent=1 // pred_check
      _
    $region23: #{tpu_custom_call.1} parent=1 // pred_check_branch
      %86 = sbr.rel (0) target = $region25
    $region24: #{tpu_custom_call.1} parent=1 // pred_region
      %87 = dma.done [#allocation4], 512
    $region25: #{tpu_custom_call.1} parent=1 // pred_fallthru
      _
    %88 = vsyncpa [#allocation3], 1
    %89 = vsyncpa [#allocation4], 1
    %90 = vsyncpa [#allocation5], 1

</llo_original>
